<compile_context>
chip_gen: v5e
topology: v5e:2x2
jax: 0.10.0
libtpu: 0.0.40
codegen_flags: <defaults>
</compile_context>

<pallas_src>
import functools

import jax
import jax.numpy as jnp
from jax.experimental import pallas as pl
from jax.experimental.pallas import tpu as pltpu


def _round_up(v, m):
    return (v + m - 1) // m * m


def _chebykan_kernel(x_ref, coeffs_ref, o_ref, *, k):
    # x_ref:      (TB, I)        float32
    # coeffs_ref: (K*I, O_pad)   float32  (resident across all batch tiles)
    # o_ref:      (TB, O_pad)    float32
    t = jnp.tanh(x_ref[...].astype(jnp.float32))           # (TB, I), EUP tanh

    # Chebyshev recurrence: T0 = 1, T1 = t, T_d = 2*t*T_{d-1} - T_{d-2}
    feats = [jnp.ones_like(t)]
    if k > 1:
        feats.append(t)
    for _ in range(2, k):
        feats.append(2.0 * t * feats[-1] - feats[-2])
    f = jnp.concatenate(feats, axis=-1)                     # (TB, K*I)

    # Single MXU matmul with contraction K*I, f32 accumulation.
    o_ref[...] = jnp.dot(
        f, coeffs_ref[...], preferred_element_type=jnp.float32
    ).astype(o_ref.dtype)


def cheby_kan_layer(x, cheby_coeffs, *, tile_b=512):
    """x: any shape reshapable to (-1, input_dim).
    cheby_coeffs: (input_dim, output_dim, degree + 1) as in the PyTorch module.
    Returns y of shape (B, output_dim)."""
    input_dim, output_dim, k = cheby_coeffs.shape
    x2d = x.reshape(-1, input_dim).astype(jnp.float32)
    b = x2d.shape[0]

    # Batch tiling: TB multiple of 8, batch zero-padded to a multiple of TB.
    tb = min(tile_b, _round_up(b, 8))
    b_pad = _round_up(b, tb)
    if b_pad != b:
        x2d = jnp.pad(x2d, ((0, b_pad - b), (0, 0)))

    # coeffs (I, O, K) -> (K, I, O) -> (K*I, O); O zero-padded to 128 lanes so
    # the output block is lane-dense.
    o_pad = _round_up(output_dim, 128)
    coeffs_flat = jnp.transpose(cheby_coeffs, (2, 0, 1)).reshape(
        k * input_dim, output_dim).astype(jnp.float32)
    if o_pad != output_dim:
        coeffs_flat = jnp.pad(coeffs_flat, ((0, 0), (0, o_pad - output_dim)))

    kernel = functools.partial(_chebykan_kernel, k=k)

    cost = pl.CostEstimate(
        flops=2 * b_pad * k * input_dim * o_pad,
        transcendentals=b_pad * input_dim,          # tanh
        bytes_accessed=4 * (x2d.size + coeffs_flat.size + b_pad * o_pad),
    )

    out = pl.pallas_call(
        kernel,
        out_shape=jax.ShapeDtypeStruct((b_pad, o_pad), jnp.float32),
        grid_spec=pltpu.PrefetchScalarGridSpec(
            num_scalar_prefetch=0,
            grid=(b_pad // tb,),
            in_specs=[
                pl.BlockSpec((tb, input_dim), lambda i: (i, 0)),
                # Constant index -> coefficients stay resident in VMEM.
                pl.BlockSpec((k * input_dim, o_pad), lambda i: (0, 0)),
            ],
            out_specs=pl.BlockSpec((tb, o_pad), lambda i: (i, 0)),
        ),
        compiler_params=pltpu.CompilerParams(
            dimension_semantics=("parallel",),
            vmem_limit_bytes=64 * 1024 * 1024,
        ),
        cost_estimate=cost,
    )(x2d, coeffs_flat)

    return out[:b, :output_dim]


def _reference(x, cheby_coeffs):
    input_dim, output_dim, k = cheby_coeffs.shape
    x2d = x.reshape(-1, input_dim)
    t = jnp.tanh(x2d)
    theta = jnp.arccos(t)[..., None]                        # (B, I, 1)
    d = jnp.arange(k, dtype=jnp.float32)                    # (K,)
    feats = jnp.cos(theta * d)                              # (B, I, K)
    return jnp.einsum('bid,iod->bo', feats, cheby_coeffs)


if __name__ == "__main__":
    input_dim = 32
    output_dim = 16
    degree = 3
    batch = 8

    key = jax.random.PRNGKey(0)
    k_x, k_w = jax.random.split(key)

    x = jax.random.normal(k_x, (batch, input_dim), dtype=jnp.float32)
    std = 1.0 / (input_dim * (degree + 1))
    cheby_coeffs = std * jax.random.normal(
        k_w, (input_dim, output_dim, degree + 1), dtype=jnp.float32)

    y = cheby_kan_layer(x, cheby_coeffs)
    jax.block_until_ready(y)

    y_ref = _reference(x, cheby_coeffs)
    assert y.shape == (batch, output_dim)
    assert jnp.allclose(y, y_ref, atol=1e-5, rtol=1e-5), (
        float(jnp.max(jnp.abs(y - y_ref))))

    print("KERNEL_OK")
</pallas_src>

<mosaic_0001>
module attributes {stable_mosaic.version = 11 : i64} {
  func.func @_chebykan_kernel(%arg0: i32, %arg1: memref<8x32xf32, #tpu.memory_space<vmem>>, %arg2: memref<128x128xf32, #tpu.memory_space<vmem>>, %arg3: memref<8x128xf32, #tpu.memory_space<vmem>>) attributes {dimension_semantics = [#tpu.dimension_semantics<parallel>], iteration_bounds = array<i64: 1>, scalar_prefetch = 0 : i64, scratch_operands = 0 : i64, tpu.core_type = #tpu.core_type<tc>, window_params = [{transform_indices = @transform_0, window_bounds = array<i64: 8, 32>}, {pipeline_mode = #tpu.pipeline_mode<synchronous>, transform_indices = @transform_1, window_bounds = array<i64: 128, 128>}, {transform_indices = @transform_2, window_bounds = array<i64: 8, 128>}]} {
    %c0 = arith.constant 0 : index
    %c0_0 = arith.constant 0 : index
    %0 = vector.load %arg1[%c0, %c0_0] : memref<8x32xf32, #tpu.memory_space<vmem>>, vector<8x32xf32>
    %1 = math.tanh %0 : vector<8x32xf32>
    %cst = arith.constant 1.000000e+00 : f32
    %2 = vector.broadcast %cst : f32 to vector<8x32xf32>
    %cst_1 = arith.constant 2.000000e+00 : f32
    %3 = vector.broadcast %cst_1 : f32 to vector<8x32xf32>
    %4 = arith.mulf %3, %1 : vector<8x32xf32>
    %5 = arith.mulf %4, %1 : vector<8x32xf32>
    %6 = arith.subf %5, %2 : vector<8x32xf32>
    %cst_2 = arith.constant 2.000000e+00 : f32
    %7 = vector.broadcast %cst_2 : f32 to vector<8x32xf32>
    %8 = arith.mulf %7, %1 : vector<8x32xf32>
    %9 = arith.mulf %8, %6 : vector<8x32xf32>
    %10 = arith.subf %9, %1 : vector<8x32xf32>
    %11 = tpu.concatenate %2, %1, %6, %10 in 1 : vector<8x32xf32>, vector<8x32xf32>, vector<8x32xf32>, vector<8x32xf32> -> vector<8x128xf32>
    %c0_3 = arith.constant 0 : index
    %c0_4 = arith.constant 0 : index
    %12 = vector.load %arg2[%c0_3, %c0_4] : memref<128x128xf32, #tpu.memory_space<vmem>>, vector<128x128xf32>
    %cst_5 = arith.constant dense<0.000000e+00> : vector<8x128xf32>
    %13 = tpu.matmul %11, %12, %cst_5 {dimension_numbers = #tpu.dot_dimension_numbers<[1], [0], [0], [1], [0, 0, 1, 1], [], []>} : vector<8x128xf32>, vector<128x128xf32>, vector<8x128xf32> -> vector<8x128xf32>
    %c0_6 = arith.constant 0 : index
    %c0_7 = arith.constant 0 : index
    %14 = vector.load %arg3[%c0_6, %c0_7] : memref<8x128xf32, #tpu.memory_space<vmem>>, vector<8x128xf32>
    tpu.vector_store %arg3[%c0_6, %c0_7], %13 {strides = array<i32>} : memref<8x128xf32, #tpu.memory_space<vmem>>, vector<8x128xf32>,
    return
  }
  func.func @transform_0(%arg0: i32) -> (i32, i32) {
    %c0_i32 = arith.constant 0 : i32
    %c0_i32_0 = arith.constant 0 : i32
    return %arg0, %c0_i32 : i32, i32
  }
  func.func @transform_1(%arg0: i32) -> (i32, i32) {
    %c0_i32 = arith.constant 0 : i32
    %c0_i32_0 = arith.constant 0 : i32
    %c0_i32_1 = arith.constant 0 : i32
    return %c0_i32, %c0_i32_0 : i32, i32
  }
  func.func @transform_2(%arg0: i32) -> (i32, i32) {
    %c0_i32 = arith.constant 0 : i32
    %c0_i32_0 = arith.constant 0 : i32
    return %arg0, %c0_i32 : i32, i32
  }
}

</mosaic_0001>

<llo_original>
// kernel: tpu_custom_call.1
$region0: #{tpu_custom_call.1}
  #allocation0 [shape = 'u32[]', space=smem, size = 0x4, offset = 0x4, fixed_abs, tag = 'smem constant byte address 0x4 - core index']
  #allocation1 [shape = 'u32[72,128]{1,0:T(1,128)}', space=vmem, size = 0x9000, scoped, tag = 'internal scratch']
  %s0 = inlined_call_operand.hbm [shape: f32[8,32], index: 0, kind: input, shape index: {}]
  %s1 = inlined_call_operand.hbm [shape: f32[128,128], index: 1, kind: input, shape index: {}]
  %s2 = inlined_call_operand.hbm [shape: f32[8,128], index: 2, kind: output, shape index: {}]
  %s3 = sld [smem:[#allocation0]]
  $region26: #{tpu_custom_call.1} parent=0
    _
  %s5 = ssub.s32 1, %s3
  %s6 = scalar_select 0, %s5, %s3
  $region1: #{tpu_custom_call.1} parent=0
    #allocation2 [shape = 'u8[4096]{0}', space=vmem, size = 0x1000, scoped, tag = 'input window, operand 0, single buffered']
    #allocation3 [shape = 's32[1]{0}', space=sflag, size = 0x4, scoped, tag = 'scoped memory for tpu_custom_call.1']
    #allocation4 [shape = 's32[1]{0}', space=sflag, size = 0x4, scoped, tag = 'scoped memory for tpu_custom_call.1']
    #allocation5 [shape = 'u8[65536]{0}', space=vmem, size = 0x10000, scoped, tag = 'input window, operand 1, single buffered']
    #allocation6 [shape = 's32[1]{0}', space=sflag, size = 0x4, scoped, tag = 'scoped memory for tpu_custom_call.1']
    #allocation7 [shape = 'u8[4096]{0}', space=vmem, size = 0x1000, scoped, tag = 'output window, operand 0, single buffered']
    %7 = vsyncpa [#allocation3], 0
    %8 = vsyncpa [#allocation6], 0
    %9 = vsyncpa [#allocation4], 0
    // Predicated region
    $region2: #{tpu_custom_call.1} parent=1 // pred_check
      _
    $region3: #{tpu_custom_call.1} parent=1 // pred_check_branch
      %11 = sbr.rel (0) target = $region5
    $region4: #{tpu_custom_call.1} parent=1 // pred_region
      %13 = vsyncadd [#allocation3], 0
      %s15 = sshll.u32 %s0, 4
      %s16 = int_to_ptr.hbm [resolvable:$true] %s15
      %s17 = sshll.u32 [#allocation2], 4
      %s18 = int_to_ptr.vmem [resolvable:$true] %s17
      %20 = dma.hbm_to_vmem [thread:$0]  %s16, 128, %s18, [#allocation3]
    $region5: #{tpu_custom_call.1} parent=1 // pred_fallthru
      _
    // Predicated region
    $region6: #{tpu_custom_call.1} parent=1 // pred_check
      _
    $region7: #{tpu_custom_call.1} parent=1 // pred_check_branch
      %22 = sbr.rel (0) target = $region9
    $region8: #{tpu_custom_call.1} parent=1 // pred_region
      %24 = vsyncadd [#allocation6], 0
      %s25 = sshll.u32 %s1, 4
      %s26 = int_to_ptr.hbm [resolvable:$true] %s25
      %s27 = sshll.u32 [#allocation5], 4
      %s28 = int_to_ptr.vmem [resolvable:$true] %s27
      %33 = dma.hbm_to_vmem [thread:$0]  %s26, 2048, %s28, [#allocation6], 128, 128, 8
    $region9: #{tpu_custom_call.1} parent=1 // pred_fallthru
      _
    // Predicated region
    $region10: #{tpu_custom_call.1} parent=1 // pred_check
      _
    $region11: #{tpu_custom_call.1} parent=1 // pred_check_branch
      %35 = sbr.rel (0) target = $region13
    $region12: #{tpu_custom_call.1} parent=1 // pred_region
      %37 = dma.done [#allocation3], 128
    $region13: #{tpu_custom_call.1} parent=1 // pred_fallthru
      _
    // Predicated region
    $region14: #{tpu_custom_call.1} parent=1 // pred_check
      _
    $region15: #{tpu_custom_call.1} parent=1 // pred_check_branch
      %39 = sbr.rel (0) target = $region17
    $region16: #{tpu_custom_call.1} parent=1 // pred_region
      %41 = dma.done [#allocation6], 2048
    $region17: #{tpu_custom_call.1} parent=1 // pred_fallthru
      _
    %v42 = vld [vmem:[#allocation2] sm:$0xff]
    %v43 = vtanh.pop %v42
    %v44 = vmul.f32 %v43, 2.0
    %v45 = vmul.f32 %v44, %v43
    %v46 = vsub.f32 %v45, 1.0
    %v47 = vmul.f32 %v44, %v46
    %v48 = vsub.f32 %v47, %v43
    %50 = vrot.lane.b32.xlu0 %v43, 32
    %v51 = vpop.permute.xlu0 %50
    %54 = vrot.lane.b32.xlu0 %v46, 64
    %v55 = vpop.permute.xlu0 %54
    %58 = vrot.lane.b32.xlu0 %v48, 96
    %v59 = vpop.permute.xlu0 %58
    %vm61 = vcmask 261120
    %v62 = vsel %vm61, 1.0, %v51
    %vm63 = vcmask 523264
    %v64 = vsel %vm63, %v62, %v55
    %vm65 = vcmask 785408
    %v66 = vsel %vm65, %v64, %v59
    %v67 = vld [vmem:[#allocation5] sm:$0xff]
    %v68 = vld [vmem:[#allocation5 + $0x8] sm:$0xff]
    %v69 = vld [vmem:[#allocation5 + $0x10] sm:$0xff]
    %v70 = vld [vmem:[#allocation5 + $0x18] sm:$0xff]
    %v71 = vld [vmem:[#allocation5 + $0x20] sm:$0xff]
    %v72 = vld [vmem:[#allocation5 + $0x28] sm:$0xff]
    %v73 = vld [vmem:[#allocation5 + $0x30] sm:$0xff]
    %v74 = vld [vmem:[#allocation5 + $0x38] sm:$0xff]
    %v75 = vld [vmem:[#allocation5 + $0x40] sm:$0xff]
    %v76 = vld [vmem:[#allocation5 + $0x48] sm:$0xff]
    %v77 = vld [vmem:[#allocation5 + $0x50] sm:$0xff]
    %v78 = vld [vmem:[#allocation5 + $0x58] sm:$0xff]
    %v79 = vld [vmem:[#allocation5 + $0x60] sm:$0xff]
    %v80 = vld [vmem:[#allocation5 + $0x68] sm:$0xff]
    %v81 = vld [vmem:[#allocation5 + $0x70] sm:$0xff]
    %v82 = vld [vmem:[#allocation5 + $0x78] sm:$0xff]
    %83 = vmatpush.msra.mxu0 %v82
    %84 = vmatpush.msra.mxu0 %v81
    %85 = vmatpush.msra.mxu0 %v80
    %86 = vmatpush.msra.mxu0 %v79
    %87 = vmatpush.msra.mxu0 %v78
    %88 = vmatpush.msra.mxu0 %v77
    %89 = vmatpush.msra.mxu0 %v76
    %90 = vmatpush.msra.mxu0 %v75
    %91 = vmatpush.msra.mxu0 %v74
    %92 = vmatpush.msra.mxu0 %v73
    %93 = vmatpush.msra.mxu0 %v72
    %94 = vmatpush.msra.mxu0 %v71
    %95 = vmatpush.msra.mxu0 %v70
    %96 = vmatpush.msra.mxu0 %v69
    %97 = vmatpush.msra.mxu0 %v68
    %98 = vmatpush.msra.mxu0 %v67
    %99 = vmatmul.f32.gmra.mxu0 %v66
    %v100 = vpop.f32.mrf.mxu0
    %v101 = vadd.f32 0.0, %v100
    %102 = vdwg.mxu0
    %103 = vst [vmem:[#allocation7] sm:$0xff] %v101
    // Predicated region
    $region18: #{tpu_custom_call.1} parent=1 // pred_check
      _
    $region19: #{tpu_custom_call.1} parent=1 // pred_check_branch
      %105 = sbr.rel (0) target = $region21
    $region20: #{tpu_custom_call.1} parent=1 // pred_region
      %107 = vsyncadd [#allocation4], 0
      %s109 = sshll.u32 [#allocation7], 4
      %s110 = int_to_ptr.vmem [resolvable:$true] %s109
      %s111 = sshll.u32 %s2, 4
      %s112 = int_to_ptr.hbm [resolvable:$true] %s111
      %114 = dma.vmem_to_hbm [thread:$0]  %s110, 128, %s112, [#allocation4]
    $region21: #{tpu_custom_call.1} parent=1 // pred_fallthru
      _
    // Predicated region
    $region22: #{tpu_custom_call.1} parent=1 // pred_check
      _
    $region23: #{tpu_custom_call.1} parent=1 // pred_check_branch
      %116 = sbr.rel (0) target = $region25
    $region24: #{tpu_custom_call.1} parent=1 // pred_region
      %118 = dma.done [#allocation4], 128
    $region25: #{tpu_custom_call.1} parent=1 // pred_fallthru
      _
    %119 = vsyncpa [#allocation3], 1
    %120 = vsyncpa [#allocation6], 1
    %121 = vsyncpa [#allocation4], 1

</llo_original>
